<compile_context>
chip_gen: v7x
topology: tpu7x:2x2x1
jax: 0.10.0
libtpu: 0.0.40
codegen_flags: <defaults>
</compile_context>

<pallas_src>
import jax
import jax.numpy as jnp
from jax.experimental import pallas as pl
from jax.experimental.pallas import tpu as pltpu


def mlp_kernel(x_ref,
               w1_ref, b1_ref,
               w2_ref, b2_ref,
               w3_ref, b3_ref,
               w4_ref, b4_ref,
               o_ref):
    x = x_ref[...]                                            # (1, tb)

    # Layer 1: in_features == 1 -> outer product on the VPU (broadcast mul),
    # keeps the MXU free instead of a K=1 matmul.
    h = w1_ref[...] * x + b1_ref[...]                         # (192, tb)
    h = jnp.maximum(h, 0.0)

    # Layer 2: (96,192) @ (192,tb) on the MXU.
    h = jnp.dot(w2_ref[...], h, preferred_element_type=jnp.float32) + b2_ref[...]
    h = jnp.maximum(h, 0.0)                                   # (96, tb)

    # Layer 3: (96,96) @ (96,tb) on the MXU.
    h = jnp.dot(w3_ref[...], h, preferred_element_type=jnp.float32) + b3_ref[...]
    h = jnp.maximum(h, 0.0)                                   # (96, tb)

    # Layer 4: (1,96) @ (96,tb) -> (1,tb); lane-dense output, unmasked stores.
    logits = jnp.dot(w4_ref[...], h, preferred_element_type=jnp.float32) + b4_ref[...]
    o_ref[...] = jax.nn.sigmoid(logits)                       # (1, tb)


def dnn_forward(x, params, *, tb=512):
    """x: (B, 1) float32. params: PyTorch-layout weights (out,in), biases (out,1)."""
    B, in_dim = x.shape
    assert in_dim == 1

    # Batch-in-lanes layout.
    x_t = x.reshape(1, B)

    if B <= tb:
        # Tiny batch: single grid step, pad batch to a 128-lane multiple so
        # loads/stores stay unmasked.
        tile = max(128, pl.cdiv(B, 128) * 128)
    else:
        # Large batch: 512 = multiple of 256 (v6e/v7x MXU width) and 128 (v5e).
        tile = tb
    B_pad = pl.cdiv(B, tile) * tile
    if B_pad != B:
        x_t = jnp.pad(x_t, ((0, 0), (0, B_pad - B)))

    w1, b1 = params["w1"], params["b1"]   # (192, 1),  (192, 1)
    w2, b2 = params["w2"], params["b2"]   # (96, 192), (96, 1)
    w3, b3 = params["w3"], params["b3"]   # (96, 96),  (96, 1)
    w4, b4 = params["w4"], params["b4"]   # (1, 96),   (1, 1)

    # Weights/biases: full-array blocks, same block every grid step (Pallas
    # keeps them resident; constant index map avoids re-fetch).
    full = lambda arr: pl.BlockSpec(arr.shape, lambda i: (0, 0))

    grid = (B_pad // tile,)
    out_t = pl.pallas_call(
        mlp_kernel,
        out_shape=jax.ShapeDtypeStruct((1, B_pad), jnp.float32),
        grid_spec=pltpu.PrefetchScalarGridSpec(
            num_scalar_prefetch=0,
            grid=grid,
            in_specs=[
                pl.BlockSpec((1, tile), lambda i: (0, i)),    # x: batch in lanes
                full(w1), full(b1),
                full(w2), full(b2),
                full(w3), full(b3),
                full(w4), full(b4),
            ],
            out_specs=pl.BlockSpec((1, tile), lambda i: (0, i)),
        ),
        compiler_params=pltpu.CompilerParams(
            dimension_semantics=("parallel",)),   # megacore-shardable on v7x
    )(x_t, w1, b1, w2, b2, w3, b3, w4, b4)

    # Back to PyTorch (B, 1) convention, dropping padded lanes.
    return out_t[:, :B].reshape(B, 1)


def init_params(key):
    """Matches PyTorch Linear default init: U(-1/sqrt(fan_in), +1/sqrt(fan_in)).
    Weights stored PyTorch-style as (out, in); biases as (out, 1)."""
    dims = [(1, 192), (192, 96), (96, 96), (96, 1)]   # (fan_in, fan_out)
    params = {}
    keys = jax.random.split(key, 2 * len(dims))
    for idx, (fan_in, fan_out) in enumerate(dims):
        bound = 1.0 / jnp.sqrt(jnp.float32(fan_in))
        kw, kb = keys[2 * idx], keys[2 * idx + 1]
        params[f"w{idx + 1}"] = jax.random.uniform(
            kw, (fan_out, fan_in), jnp.float32, -bound, bound)
        params[f"b{idx + 1}"] = jax.random.uniform(
            kb, (fan_out, 1), jnp.float32, -bound, bound)
    return params


def dnn_reference(x, params):
    h = jnp.maximum(x @ params["w1"].T + params["b1"].T, 0.0)
    h = jnp.maximum(h @ params["w2"].T + params["b2"].T, 0.0)
    h = jnp.maximum(h @ params["w3"].T + params["b3"].T, 0.0)
    return jax.nn.sigmoid(h @ params["w4"].T + params["b4"].T)


if __name__ == "__main__":
    key = jax.random.PRNGKey(0)
    k_params, k_x = jax.random.split(key)

    params = init_params(k_params)
    B = 16
    x = jax.random.normal(k_x, (B, 1), dtype=jnp.float32)

    out = dnn_forward(x, params)
    out = jax.block_until_ready(out)

    ref = dnn_reference(x, params)
    assert out.shape == (B, 1)
    assert jnp.allclose(out, ref, atol=1e-5, rtol=1e-5)

    print("KERNEL_OK")
</pallas_src>

<mosaic_0001>
module attributes {stable_mosaic.version = 11 : i64} {
  func.func @mlp_kernel(%arg0: i32, %arg1: memref<1x128xf32, #tpu.memory_space<vmem>>, %arg2: memref<192x1xf32, #tpu.memory_space<vmem>>, %arg3: memref<192x1xf32, #tpu.memory_space<vmem>>, %arg4: memref<96x192xf32, #tpu.memory_space<vmem>>, %arg5: memref<96x1xf32, #tpu.memory_space<vmem>>, %arg6: memref<96x96xf32, #tpu.memory_space<vmem>>, %arg7: memref<96x1xf32, #tpu.memory_space<vmem>>, %arg8: memref<1x96xf32, #tpu.memory_space<vmem>>, %arg9: memref<1x1xf32, #tpu.memory_space<vmem>>, %arg10: memref<1x128xf32, #tpu.memory_space<vmem>>) attributes {dimension_semantics = [#tpu.dimension_semantics<parallel>], iteration_bounds = array<i64: 1>, scalar_prefetch = 0 : i64, scratch_operands = 0 : i64, tpu.core_type = #tpu.core_type<tc>, window_params = [{transform_indices = @transform_0, window_bounds = array<i64: 1, 128>}, {pipeline_mode = #tpu.pipeline_mode<synchronous>, transform_indices = @transform_1, window_bounds = array<i64: 192, 1>}, {pipeline_mode = #tpu.pipeline_mode<synchronous>, transform_indices = @transform_2, window_bounds = array<i64: 192, 1>}, {pipeline_mode = #tpu.pipeline_mode<synchronous>, transform_indices = @transform_3, window_bounds = array<i64: 96, 192>}, {pipeline_mode = #tpu.pipeline_mode<synchronous>, transform_indices = @transform_4, window_bounds = array<i64: 96, 1>}, {pipeline_mode = #tpu.pipeline_mode<synchronous>, transform_indices = @transform_5, window_bounds = array<i64: 96, 96>}, {pipeline_mode = #tpu.pipeline_mode<synchronous>, transform_indices = @transform_6, window_bounds = array<i64: 96, 1>}, {pipeline_mode = #tpu.pipeline_mode<synchronous>, transform_indices = @transform_7, window_bounds = array<i64: 1, 96>}, {pipeline_mode = #tpu.pipeline_mode<synchronous>, transform_indices = @transform_8, window_bounds = array<i64: 1, 1>}, {transform_indices = @transform_9, window_bounds = array<i64: 1, 128>}]} {
    %c0 = arith.constant 0 : index
    %c0_0 = arith.constant 0 : index
    %0 = vector.load %arg1[%c0, %c0_0] : memref<1x128xf32, #tpu.memory_space<vmem>>, vector<1x128xf32>
    %c0_1 = arith.constant 0 : index
    %c0_2 = arith.constant 0 : index
    %1 = vector.load %arg2[%c0_1, %c0_2] : memref<192x1xf32, #tpu.memory_space<vmem>>, vector<192x1xf32>
    %2 = vector.broadcast %1 : vector<192x1xf32> to vector<192x128xf32>
    %3 = vector.broadcast %0 : vector<1x128xf32> to vector<192x128xf32>
    %4 = arith.mulf %2, %3 : vector<192x128xf32>
    %c0_3 = arith.constant 0 : index
    %c0_4 = arith.constant 0 : index
    %5 = vector.load %arg3[%c0_3, %c0_4] : memref<192x1xf32, #tpu.memory_space<vmem>>, vector<192x1xf32>
    %6 = vector.broadcast %5 : vector<192x1xf32> to vector<192x128xf32>
    %7 = arith.addf %4, %6 : vector<192x128xf32>
    %cst = arith.constant 0.000000e+00 : f32
    %8 = vector.broadcast %cst : f32 to vector<192x128xf32>
    %9 = arith.maximumf %7, %8 : vector<192x128xf32>
    %c0_5 = arith.constant 0 : index
    %c0_6 = arith.constant 0 : index
    %10 = vector.load %arg4[%c0_5, %c0_6] : memref<96x192xf32, #tpu.memory_space<vmem>>, vector<96x192xf32>
    %cst_7 = arith.constant dense<0.000000e+00> : vector<96x128xf32>
    %11 = tpu.matmul %10, %9, %cst_7 {dimension_numbers = #tpu.dot_dimension_numbers<[1], [0], [0], [1], [0, 0, 1, 1], [], []>} : vector<96x192xf32>, vector<192x128xf32>, vector<96x128xf32> -> vector<96x128xf32>
    %c0_8 = arith.constant 0 : index
    %c0_9 = arith.constant 0 : index
    %12 = vector.load %arg5[%c0_8, %c0_9] : memref<96x1xf32, #tpu.memory_space<vmem>>, vector<96x1xf32>
    %13 = vector.broadcast %12 : vector<96x1xf32> to vector<96x128xf32>
    %14 = arith.addf %11, %13 : vector<96x128xf32>
    %cst_10 = arith.constant 0.000000e+00 : f32
    %15 = vector.broadcast %cst_10 : f32 to vector<96x128xf32>
    %16 = arith.maximumf %14, %15 : vector<96x128xf32>
    %c0_11 = arith.constant 0 : index
    %c0_12 = arith.constant 0 : index
    %17 = vector.load %arg6[%c0_11, %c0_12] : memref<96x96xf32, #tpu.memory_space<vmem>>, vector<96x96xf32>
    %cst_13 = arith.constant dense<0.000000e+00> : vector<96x128xf32>
    %18 = tpu.matmul %17, %16, %cst_13 {dimension_numbers = #tpu.dot_dimension_numbers<[1], [0], [0], [1], [0, 0, 1, 1], [], []>} : vector<96x96xf32>, vector<96x128xf32>, vector<96x128xf32> -> vector<96x128xf32>
    %c0_14 = arith.constant 0 : index
    %c0_15 = arith.constant 0 : index
    %19 = vector.load %arg7[%c0_14, %c0_15] : memref<96x1xf32, #tpu.memory_space<vmem>>, vector<96x1xf32>
    %20 = vector.broadcast %19 : vector<96x1xf32> to vector<96x128xf32>
    %21 = arith.addf %18, %20 : vector<96x128xf32>
    %cst_16 = arith.constant 0.000000e+00 : f32
    %22 = vector.broadcast %cst_16 : f32 to vector<96x128xf32>
    %23 = arith.maximumf %21, %22 : vector<96x128xf32>
    %c0_17 = arith.constant 0 : index
    %c0_18 = arith.constant 0 : index
    %24 = vector.load %arg8[%c0_17, %c0_18] : memref<1x96xf32, #tpu.memory_space<vmem>>, vector<1x96xf32>
    %cst_19 = arith.constant dense<0.000000e+00> : vector<1x128xf32>
    %25 = tpu.matmul %24, %23, %cst_19 {dimension_numbers = #tpu.dot_dimension_numbers<[1], [0], [0], [1], [0, 0, 1, 1], [], []>} : vector<1x96xf32>, vector<96x128xf32>, vector<1x128xf32> -> vector<1x128xf32>
    %c0_20 = arith.constant 0 : index
    %c0_21 = arith.constant 0 : index
    %26 = vector.load %arg9[%c0_20, %c0_21] : memref<1x1xf32, #tpu.memory_space<vmem>>, vector<1x1xf32>
    %27 = vector.broadcast %26 : vector<1x1xf32> to vector<1x128xf32>
    %28 = arith.addf %25, %27 : vector<1x128xf32>
    %29 = arith.negf %28 : vector<1x128xf32>
    %30 = math.exp %29 : vector<1x128xf32>
    %cst_22 = arith.constant 1.000000e+00 : f32
    %31 = vector.broadcast %cst_22 : f32 to vector<1x128xf32>
    %32 = arith.addf %31, %30 : vector<1x128xf32>
    %33 = arith.divf %31, %32 : vector<1x128xf32>
    %c0_23 = arith.constant 0 : index
    %c0_24 = arith.constant 0 : index
    %34 = vector.load %arg10[%c0_23, %c0_24] : memref<1x128xf32, #tpu.memory_space<vmem>>, vector<1x128xf32>
    tpu.vector_store %arg10[%c0_23, %c0_24], %33 {strides = array<i32>} : memref<1x128xf32, #tpu.memory_space<vmem>>, vector<1x128xf32>,
    return
  }
  func.func @transform_0(%arg0: i32) -> (i32, i32) {
    %c0_i32 = arith.constant 0 : i32
    %c0_i32_0 = arith.constant 0 : i32
    return %c0_i32, %arg0 : i32, i32
  }
  func.func @transform_1(%arg0: i32) -> (i32, i32) {
    %c0_i32 = arith.constant 0 : i32
    %c0_i32_0 = arith.constant 0 : i32
    %c0_i32_1 = arith.constant 0 : i32
    return %c0_i32, %c0_i32_0 : i32, i32
  }
  func.func @transform_2(%arg0: i32) -> (i32, i32) {
    %c0_i32 = arith.constant 0 : i32
    %c0_i32_0 = arith.constant 0 : i32
    %c0_i32_1 = arith.constant 0 : i32
    return %c0_i32, %c0_i32_0 : i32, i32
  }
  func.func @transform_3(%arg0: i32) -> (i32, i32) {
    %c0_i32 = arith.constant 0 : i32
    %c0_i32_0 = arith.constant 0 : i32
    %c0_i32_1 = arith.constant 0 : i32
    return %c0_i32, %c0_i32_0 : i32, i32
  }
  func.func @transform_4(%arg0: i32) -> (i32, i32) {
    %c0_i32 = arith.constant 0 : i32
    %c0_i32_0 = arith.constant 0 : i32
    %c0_i32_1 = arith.constant 0 : i32
    return %c0_i32, %c0_i32_0 : i32, i32
  }
  func.func @transform_5(%arg0: i32) -> (i32, i32) {
    %c0_i32 = arith.constant 0 : i32
    %c0_i32_0 = arith.constant 0 : i32
    %c0_i32_1 = arith.constant 0 : i32
    return %c0_i32, %c0_i32_0 : i32, i32
  }
  func.func @transform_6(%arg0: i32) -> (i32, i32) {
    %c0_i32 = arith.constant 0 : i32
    %c0_i32_0 = arith.constant 0 : i32
    %c0_i32_1 = arith.constant 0 : i32
    return %c0_i32, %c0_i32_0 : i32, i32
  }
  func.func @transform_7(%arg0: i32) -> (i32, i32) {
    %c0_i32 = arith.constant 0 : i32
    %c0_i32_0 = arith.constant 0 : i32
    %c0_i32_1 = arith.constant 0 : i32
    return %c0_i32, %c0_i32_0 : i32, i32
  }
  func.func @transform_8(%arg0: i32) -> (i32, i32) {
    %c0_i32 = arith.constant 0 : i32
    %c0_i32_0 = arith.constant 0 : i32
    %c0_i32_1 = arith.constant 0 : i32
    return %c0_i32, %c0_i32_0 : i32, i32
  }
  func.func @transform_9(%arg0: i32) -> (i32, i32) {
    %c0_i32 = arith.constant 0 : i32
    %c0_i32_0 = arith.constant 0 : i32
    return %c0_i32, %arg0 : i32, i32
  }
}

</mosaic_0001>

<llo_original>
// kernel: tpu_custom_call.1
$region0: #{tpu_custom_call.1}
  #allocation0 [shape = 'u32[]', space=smem, size = 0x4, offset = 0x4, fixed_abs, tag = 'smem constant byte address 0x4 - core index']
  #allocation1 [shape = 'u32[144,128]{1,0:T(1,128)}', space=vmem, size = 0x12000, scoped, tag = 'internal scratch']
  #allocation2 [shape = 'f32[1,1]{1,0:T(1,128)S(1)}', space=vmem, size = 0x200, scoped, tag = 'scoped memory for tpu_custom_call.1']
  %s0 = inlined_call_operand.vmem [shape: f32[1,128], index: 0, kind: input, shape index: {}]
  %s1 = inlined_call_operand.vmem [shape: f32[192,1], index: 1, kind: input, shape index: {}]
  %s2 = inlined_call_operand.vmem [shape: f32[192,1], index: 2, kind: input, shape index: {}]
  %s3 = inlined_call_operand.vmem [shape: f32[96,192], index: 3, kind: input, shape index: {}]
  %s4 = inlined_call_operand.vmem [shape: f32[96,1], index: 4, kind: input, shape index: {}]
  %s5 = inlined_call_operand.vmem [shape: f32[96,96], index: 5, kind: input, shape index: {}]
  %s6 = inlined_call_operand.vmem [shape: f32[96,1], index: 6, kind: input, shape index: {}]
  %s7 = inlined_call_operand.vmem [shape: f32[1,96], index: 7, kind: input, shape index: {}]
  %s8 = inlined_call_operand.<no memory space> [shape: f32[1,1], index: 8, kind: input, shape index: {}]
  %s9 = inlined_call_operand.hbm [shape: f32[1,128], index: 9, kind: output, shape index: {}]
  %s10 = sld [smem:[#allocation0]]
  $region46: #{tpu_custom_call.1} parent=0
    _
  %s12 = ssub.s32 1, %s10
  %s13 = scalar_select 0, %s12, %s10
  %v14 = vstv %s8
  %15 = vst [vmem:[#allocation2] sm:$0x1] %v14
  $region1: #{tpu_custom_call.1} parent=0
    #allocation3 [shape = 'u8[512]{0}', space=vmem, size = 0x400, scoped, tag = 'output window, operand 0, single buffered']
    #allocation4 [shape = 's32[1]{0}', space=sflag, size = 0x4, scoped, tag = 'scoped memory for tpu_custom_call.1']
    %16 = vsyncpa [#allocation4], 0
    // Predicated region
    $region2: #{tpu_custom_call.1} parent=1 // pred_check
      _
    $region3: #{tpu_custom_call.1} parent=1 // pred_check_branch
      %18 = sbr.rel (0) target = $region5
    $region4: #{tpu_custom_call.1} parent=1 // pred_region
      _
    $region5: #{tpu_custom_call.1} parent=1 // pred_fallthru
      _
    // Predicated region
    $region6: #{tpu_custom_call.1} parent=1 // pred_check
      _
    $region7: #{tpu_custom_call.1} parent=1 // pred_check_branch
      %20 = sbr.rel (0) target = $region9
    $region8: #{tpu_custom_call.1} parent=1 // pred_region
      _
    $region9: #{tpu_custom_call.1} parent=1 // pred_fallthru
      _
    // Predicated region
    $region10: #{tpu_custom_call.1} parent=1 // pred_check
      _
    $region11: #{tpu_custom_call.1} parent=1 // pred_check_branch
      %22 = sbr.rel (0) target = $region13
    $region12: #{tpu_custom_call.1} parent=1 // pred_region
      _
    $region13: #{tpu_custom_call.1} parent=1 // pred_fallthru
      _
    // Predicated region
    $region14: #{tpu_custom_call.1} parent=1 // pred_check
      _
    $region15: #{tpu_custom_call.1} parent=1 // pred_check_branch
      %24 = sbr.rel (0) target = $region17
    $region16: #{tpu_custom_call.1} parent=1 // pred_region
      _
    $region17: #{tpu_custom_call.1} parent=1 // pred_fallthru
      _
    // Predicated region
    $region18: #{tpu_custom_call.1} parent=1 // pred_check
      _
    $region19: #{tpu_custom_call.1} parent=1 // pred_check_branch
      %26 = sbr.rel (0) target = $region21
    $region20: #{tpu_custom_call.1} parent=1 // pred_region
      _
    $region21: #{tpu_custom_call.1} parent=1 // pred_fallthru
      _
    // Predicated region
    $region22: #{tpu_custom_call.1} parent=1 // pred_check
      _
    $region23: #{tpu_custom_call.1} parent=1 // pred_check_branch
      %28 = sbr.rel (0) target = $region25
    $region24: #{tpu_custom_call.1} parent=1 // pred_region
      _
    $region25: #{tpu_custom_call.1} parent=1 // pred_fallthru
      _
    // Predicated region
    $region26: #{tpu_custom_call.1} parent=1 // pred_check
      _
    $region27: #{tpu_custom_call.1} parent=1 // pred_check_branch
      %30 = sbr.rel (0) target = $region29
    $region28: #{tpu_custom_call.1} parent=1 // pred_region
      _
    $region29: #{tpu_custom_call.1} parent=1 // pred_fallthru
      _
    // Predicated region
    $region30: #{tpu_custom_call.1} parent=1 // pred_check
      _
    $region31: #{tpu_custom_call.1} parent=1 // pred_check_branch
      %32 = sbr.rel (0) target = $region33
    $region32: #{tpu_custom_call.1} parent=1 // pred_region
      _
    $region33: #{tpu_custom_call.1} parent=1 // pred_fallthru
      _
    // Predicated region
    $region34: #{tpu_custom_call.1} parent=1 // pred_check
      _
    $region35: #{tpu_custom_call.1} parent=1 // pred_check_branch
      %34 = sbr.rel (0) target = $region37
    $region36: #{tpu_custom_call.1} parent=1 // pred_region
      _
    $region37: #{tpu_custom_call.1} parent=1 // pred_fallthru
      _
    %v35 = vld [vmem:[%s0] sm:$0x1]
    %v36 = vld [vmem:[%s1] sm:$0xff]
    %v37 = vld [vmem:[%s1 + $0x8] sm:$0xff]
    %v38 = vld [vmem:[%s1 + $0x10] sm:$0xff]
    %v39 = vld [vmem:[%s1 + $0x18] sm:$0xff]
    %v40 = vld [vmem:[%s1 + $0x20] sm:$0xff]
    %v41 = vld [vmem:[%s1 + $0x28] sm:$0xff]
    %v42 = vld [vmem:[%s1 + $0x30] sm:$0xff]
    %v43 = vld [vmem:[%s1 + $0x38] sm:$0xff]
    %v44 = vld [vmem:[%s1 + $0x40] sm:$0xff]
    %v45 = vld [vmem:[%s1 + $0x48] sm:$0xff]
    %v46 = vld [vmem:[%s1 + $0x50] sm:$0xff]
    %v47 = vld [vmem:[%s1 + $0x58] sm:$0xff]
    %v48 = vld [vmem:[%s1 + $0x60] sm:$0xff]
    %v49 = vld [vmem:[%s1 + $0x68] sm:$0xff]
    %v50 = vld [vmem:[%s1 + $0x70] sm:$0xff]
    %v51 = vld [vmem:[%s1 + $0x78] sm:$0xff]
    %v52 = vld [vmem:[%s1 + $0x80] sm:$0xff]
    %v53 = vld [vmem:[%s1 + $0x88] sm:$0xff]
    %v54 = vld [vmem:[%s1 + $0x90] sm:$0xff]
    %v55 = vld [vmem:[%s1 + $0x98] sm:$0xff]
    %v56 = vld [vmem:[%s1 + $0xa0] sm:$0xff]
    %v57 = vld [vmem:[%s1 + $0xa8] sm:$0xff]
    %v58 = vld [vmem:[%s1 + $0xb0] sm:$0xff]
    %v59 = vld [vmem:[%s1 + $0xb8] sm:$0xff]
    %61 = vset.pattern.permute.xlu0 0
    %62 = vperm.xlu0 %61, %v36
    %v63 = vpop.permute.xlu0 %62
    %66 = vset.pattern.permute.xlu0 0
    %67 = vperm.xlu0 %66, %v37
    %v68 = vpop.permute.xlu0 %67
    %71 = vset.pattern.permute.xlu0 0
    %72 = vperm.xlu0 %71, %v38
    %v73 = vpop.permute.xlu0 %72
    %76 = vset.pattern.permute.xlu0 0
    %77 = vperm.xlu0 %76, %v39
    %v78 = vpop.permute.xlu0 %77
    %81 = vset.pattern.permute.xlu0 0
    %82 = vperm.xlu0 %81, %v40
    %v83 = vpop.permute.xlu0 %82
    %86 = vset.pattern.permute.xlu0 0
    %87 = vperm.xlu0 %86, %v41
    %v88 = vpop.permute.xlu0 %87
    %91 = vset.pattern.permute.xlu0 0
    %92 = vperm.xlu0 %91, %v42
    %v93 = vpop.permute.xlu0 %92
    %96 = vset.pattern.permute.xlu0 0
    %97 = vperm.xlu0 %96, %v43
    %v98 = vpop.permute.xlu0 %97
    %101 = vset.pattern.permute.xlu0 0
    %102 = vperm.xlu0 %101, %v44
    %v103 = vpop.permute.xlu0 %102
    %106 = vset.pattern.permute.xlu0 0
    %107 = vperm.xlu0 %106, %v45
    %v108 = vpop.permute.xlu0 %107
    %111 = vset.pattern.permute.xlu0 0
    %112 = vperm.xlu0 %111, %v46
    %v113 = vpop.permute.xlu0 %112
    %116 = vset.pattern.permute.xlu0 0
    %117 = vperm.xlu0 %116, %v47
    %v118 = vpop.permute.xlu0 %117
    %121 = vset.pattern.permute.xlu0 0
    %122 = vperm.xlu0 %121, %v48
    %v123 = vpop.permute.xlu0 %122
    %126 = vset.pattern.permute.xlu0 0
    %127 = vperm.xlu0 %126, %v49
    %v128 = vpop.permute.xlu0 %127
    %131 = vset.pattern.permute.xlu0 0
    %132 = vperm.xlu0 %131, %v50
    %v133 = vpop.permute.xlu0 %132
    %136 = vset.pattern.permute.xlu0 0
    %137 = vperm.xlu0 %136, %v51
    %v138 = vpop.permute.xlu0 %137
    %141 = vset.pattern.permute.xlu0 0
    %142 = vperm.xlu0 %141, %v52
    %v143 = vpop.permute.xlu0 %142
    %146 = vset.pattern.permute.xlu0 0
    %147 = vperm.xlu0 %146, %v53
    %v148 = vpop.permute.xlu0 %147
    %151 = vset.pattern.permute.xlu0 0
    %152 = vperm.xlu0 %151, %v54
    %v153 = vpop.permute.xlu0 %152
    %156 = vset.pattern.permute.xlu0 0
    %157 = vperm.xlu0 %156, %v55
    %v158 = vpop.permute.xlu0 %157
    %161 = vset.pattern.permute.xlu0 0
    %162 = vperm.xlu0 %161, %v56
    %v163 = vpop.permute.xlu0 %162
    %166 = vset.pattern.permute.xlu0 0
    %167 = vperm.xlu0 %166, %v57
    %v168 = vpop.permute.xlu0 %167
    %171 = vset.pattern.permute.xlu0 0
    %172 = vperm.xlu0 %171, %v58
    %v173 = vpop.permute.xlu0 %172
    %176 = vset.pattern.permute.xlu0 0
    %177 = vperm.xlu0 %176, %v59
    %v178 = vpop.permute.xlu0 %177
    %v181 = vlaneseq
    %v182 = vshrl.u32 %v181, 7
    %v183 = vsub.s32 0, %v182
    %v184 = vrot.slane %v35, %v183
    %v186 = vmul.f32 %v63, %v184
    %v187 = vmul.f32 %v68, %v184
    %v188 = vmul.f32 %v73, %v184
    %v189 = vmul.f32 %v78, %v184
    %v190 = vmul.f32 %v83, %v184
    %v191 = vmul.f32 %v88, %v184
    %v192 = vmul.f32 %v93, %v184
    %v193 = vmul.f32 %v98, %v184
    %v194 = vmul.f32 %v103, %v184
    %v195 = vmul.f32 %v108, %v184
    %v196 = vmul.f32 %v113, %v184
    %v197 = vmul.f32 %v118, %v184
    %v198 = vmul.f32 %v123, %v184
    %v199 = vmul.f32 %v128, %v184
    %v200 = vmul.f32 %v133, %v184
    %v201 = vmul.f32 %v138, %v184
    %v202 = vmul.f32 %v143, %v184
    %v203 = vmul.f32 %v148, %v184
    %v204 = vmul.f32 %v153, %v184
    %v205 = vmul.f32 %v158, %v184
    %v206 = vmul.f32 %v163, %v184
    %v207 = vmul.f32 %v168, %v184
    %v208 = vmul.f32 %v173, %v184
    %v209 = vmul.f32 %v178, %v184
    %v210 = vld [vmem:[%s2] sm:$0xff]
    %v211 = vld [vmem:[%s2 + $0x8] sm:$0xff]
    %v212 = vld [vmem:[%s2 + $0x10] sm:$0xff]
    %v213 = vld [vmem:[%s2 + $0x18] sm:$0xff]
    %v214 = vld [vmem:[%s2 + $0x20] sm:$0xff]
    %v215 = vld [vmem:[%s2 + $0x28] sm:$0xff]
    %v216 = vld [vmem:[%s2 + $0x30] sm:$0xff]
    %v217 = vld [vmem:[%s2 + $0x38] sm:$0xff]
    %v218 = vld [vmem:[%s2 + $0x40] sm:$0xff]
    %v219 = vld [vmem:[%s2 + $0x48] sm:$0xff]
    %v220 = vld [vmem:[%s2 + $0x50] sm:$0xff]
    %v221 = vld [vmem:[%s2 + $0x58] sm:$0xff]
    %v222 = vld [vmem:[%s2 + $0x60] sm:$0xff]
    %v223 = vld [vmem:[%s2 + $0x68] sm:$0xff]
    %v224 = vld [vmem:[%s2 + $0x70] sm:$0xff]
    %v225 = vld [vmem:[%s2 + $0x78] sm:$0xff]
    %v226 = vld [vmem:[%s2 + $0x80] sm:$0xff]
    %v227 = vld [vmem:[%s2 + $0x88] sm:$0xff]
    %v228 = vld [vmem:[%s2 + $0x90] sm:$0xff]
    %v229 = vld [vmem:[%s2 + $0x98] sm:$0xff]
    %v230 = vld [vmem:[%s2 + $0xa0] sm:$0xff]
    %v231 = vld [vmem:[%s2 + $0xa8] sm:$0xff]
    %v232 = vld [vmem:[%s2 + $0xb0] sm:$0xff]
    %v233 = vld [vmem:[%s2 + $0xb8] sm:$0xff]
    %235 = vset.pattern.permute.xlu0 0
    %236 = vperm.xlu0 %235, %v210
    %v237 = vpop.permute.xlu0 %236
    %240 = vset.pattern.permute.xlu0 0
    %241 = vperm.xlu0 %240, %v211
    %v242 = vpop.permute.xlu0 %241
    %245 = vset.pattern.permute.xlu0 0
    %246 = vperm.xlu0 %245, %v212
    %v247 = vpop.permute.xlu0 %246
    %250 = vset.pattern.permute.xlu0 0
    %251 = vperm.xlu0 %250, %v213
    %v252 = vpop.permute.xlu0 %251
    %255 = vset.pattern.permute.xlu0 0
    %256 = vperm.xlu0 %255, %v214
    %v257 = vpop.permute.xlu0 %256
    %260 = vset.pattern.permute.xlu0 0
    %261 = vperm.xlu0 %260, %v215
    %v262 = vpop.permute.xlu0 %261
    %265 = vset.pattern.permute.xlu0 0
    %266 = vperm.xlu0 %265, %v216
    %v267 = vpop.permute.xlu0 %266
    %270 = vset.pattern.permute.xlu0 0
    %271 = vperm.xlu0 %270, %v217
    %v272 = vpop.permute.xlu0 %271
    %275 = vset.pattern.permute.xlu0 0
    %276 = vperm.xlu0 %275, %v218
    %v277 = vpop.permute.xlu0 %276
    %280 = vset.pattern.permute.xlu0 0
    %281 = vperm.xlu0 %280, %v219
    %v282 = vpop.permute.xlu0 %281
    %285 = vset.pattern.permute.xlu0 0
    %286 = vperm.xlu0 %285, %v220
    %v287 = vpop.permute.xlu0 %286
    %290 = vset.pattern.permute.xlu0 0
    %291 = vperm.xlu0 %290, %v221
    %v292 = vpop.permute.xlu0 %291
    %295 = vset.pattern.permute.xlu0 0
    %296 = vperm.xlu0 %295, %v222
    %v297 = vpop.permute.xlu0 %296
    %300 = vset.pattern.permute.xlu0 0
    %301 = vperm.xlu0 %300, %v223
    %v302 = vpop.permute.xlu0 %301
    %305 = vset.pattern.permute.xlu0 0
    %306 = vperm.xlu0 %305, %v224
    %v307 = vpop.permute.xlu0 %306
    %310 = vset.pattern.permute.xlu0 0
    %311 = vperm.xlu0 %310, %v225
    %v312 = vpop.permute.xlu0 %311
    %315 = vset.pattern.permute.xlu0 0
    %316 = vperm.xlu0 %315, %v226
    %v317 = vpop.permute.xlu0 %316
    %320 = vset.pattern.permute.xlu0 0
    %321 = vperm.xlu0 %320, %v227
    %v322 = vpop.permute.xlu0 %321
    %325 = vset.pattern.permute.xlu0 0
    %326 = vperm.xlu0 %325, %v228
    %v327 = vpop.permute.xlu0 %326
    %330 = vset.pattern.permute.xlu0 0
    %331 = vperm.xlu0 %330, %v229
    %v332 = vpop.permute.xlu0 %331
    %335 = vset.pattern.permute.xlu0 0
    %336 = vperm.xlu0 %335, %v230
    %v337 = vpop.permute.xlu0 %336
    %340 = vset.pattern.permute.xlu0 0
    %341 = vperm.xlu0 %340, %v231
    %v342 = vpop.permute.xlu0 %341
    %345 = vset.pattern.permute.xlu0 0
    %346 = vperm.xlu0 %345, %v232
    %v347 = vpop.permute.xlu0 %346
    %350 = vset.pattern.permute.xlu0 0
    %351 = vperm.xlu0 %350, %v233
    %v352 = vpop.permute.xlu0 %351
    %v354 = vadd.f32 %v186, %v237
    %v355 = vadd.f32 %v187, %v242
    %v356 = vadd.f32 %v188, %v247
    %v357 = vadd.f32 %v189, %v252
    %v358 = vadd.f32 %v190, %v257
    %v359 = vadd.f32 %v191, %v262
    %v360 = vadd.f32 %v192, %v267
    %v361 = vadd.f32 %v193, %v272
    %v362 = vadd.f32 %v194, %v277
    %v363 = vadd.f32 %v195, %v282
    %v364 = vadd.f32 %v196, %v287
    %v365 = vadd.f32 %v197, %v292
    %v366 = vadd.f32 %v198, %v297
    %v367 = vadd.f32 %v199, %v302
    %v368 = vadd.f32 %v200, %v307
    %v369 = vadd.f32 %v201, %v312
    %v370 = vadd.f32 %v202, %v317
    %v371 = vadd.f32 %v203, %v322
    %v372 = vadd.f32 %v204, %v327
    %v373 = vadd.f32 %v205, %v332
    %v374 = vadd.f32 %v206, %v337
    %v375 = vadd.f32 %v207, %v342
    %v376 = vadd.f32 %v208, %v347
    %v377 = vadd.f32 %v209, %v352
    %v378 = vmax.f32 %v354, 0.0
    %v379 = vmax.f32 %v355, 0.0
    %v380 = vmax.f32 %v356, 0.0
    %v381 = vmax.f32 %v357, 0.0
    %v382 = vmax.f32 %v358, 0.0
    %v383 = vmax.f32 %v359, 0.0
    %v384 = vmax.f32 %v360, 0.0
    %v385 = vmax.f32 %v361, 0.0
    %v386 = vmax.f32 %v362, 0.0
    %v387 = vmax.f32 %v363, 0.0
    %v388 = vmax.f32 %v364, 0.0
    %v389 = vmax.f32 %v365, 0.0
    %v390 = vmax.f32 %v366, 0.0
    %v391 = vmax.f32 %v367, 0.0
    %v392 = vmax.f32 %v368, 0.0
    %v393 = vmax.f32 %v369, 0.0
    %v394 = vmax.f32 %v370, 0.0
    %v395 = vmax.f32 %v371, 0.0
    %v396 = vmax.f32 %v372, 0.0
    %v397 = vmax.f32 %v373, 0.0
    %v398 = vmax.f32 %v374, 0.0
    %v399 = vmax.f32 %v375, 0.0
    %v400 = vmax.f32 %v376, 0.0
    %v401 = vmax.f32 %v377, 0.0
    %v402 = vld [vmem:[%s3] sm:$0xff]
    %v403 = vld [vmem:[%s3 + $0x8] sm:$0xff]
    %v404 = vld [vmem:[%s3 + $0x10] sm:$0xff]
    %v405 = vld [vmem:[%s3 + $0x18] sm:$0xff]
    %v406 = vld [vmem:[%s3 + $0x20] sm:$0xff]
    %v407 = vld [vmem:[%s3 + $0x28] sm:$0xff]
    %v408 = vld [vmem:[%s3 + $0x30] sm:$0xff]
    %v409 = vld [vmem:[%s3 + $0x38] sm:$0xff]
    %v410 = vld [vmem:[%s3 + $0x40] sm:$0xff]
    %v411 = vld [vmem:[%s3 + $0x48] sm:$0xff]
    %v412 = vld [vmem:[%s3 + $0x50] sm:$0xff]
    %v413 = vld [vmem:[%s3 + $0x58] sm:$0xff]
    %v414 = vld [vmem:[%s3 + $0x60] sm:$0xff]
    %v415 = vld [vmem:[%s3 + $0x68] sm:$0xff]
    %v416 = vld [vmem:[%s3 + $0x70] sm:$0xff]
    %v417 = vld [vmem:[%s3 + $0x78] sm:$0xff]
    %v418 = vld [vmem:[%s3 + $0x80] sm:$0xff]
    %v419 = vld [vmem:[%s3 + $0x88] sm:$0xff]
    %v420 = vld [vmem:[%s3 + $0x90] sm:$0xff]
    %v421 = vld [vmem:[%s3 + $0x98] sm:$0xff]
    %v422 = vld [vmem:[%s3 + $0xa0] sm:$0xff]
    %v423 = vld [vmem:[%s3 + $0xa8] sm:$0xff]
    %v424 = vld [vmem:[%s3 + $0xb0] sm:$0xff]
    %v425 = vld [vmem:[%s3 + $0xb8] sm:$0xff]
    %v426 = vld [vmem:[%s4] sm:$0xff]
    %v427 = vld [vmem:[%s4 + $0x8] sm:$0xff]
    %v428 = vld [vmem:[%s4 + $0x10] sm:$0xff]
    %v429 = vld [vmem:[%s4 + $0x18] sm:$0xff]
    %v430 = vld [vmem:[%s4 + $0x20] sm:$0xff]
    %v431 = vld [vmem:[%s4 + $0x28] sm:$0xff]
    %v432 = vld [vmem:[%s4 + $0x30] sm:$0xff]
    %v433 = vld [vmem:[%s4 + $0x38] sm:$0xff]
    %v434 = vld [vmem:[%s4 + $0x40] sm:$0xff]
    %v435 = vld [vmem:[%s4 + $0x48] sm:$0xff]
    %v436 = vld [vmem:[%s4 + $0x50] sm:$0xff]
    %v437 = vld [vmem:[%s4 + $0x58] sm:$0xff]
    %439 = vset.pattern.permute.xlu0 0
    %440 = vperm.xlu0 %439, %v426
    %v441 = vpop.permute.xlu0 %440
    %444 = vset.pattern.permute.xlu0 0
    %445 = vperm.xlu0 %444, %v427
    %v446 = vpop.permute.xlu0 %445
    %449 = vset.pattern.permute.xlu0 0
    %450 = vperm.xlu0 %449, %v428
    %v451 = vpop.permute.xlu0 %450
    %454 = vset.pattern.permute.xlu0 0
    %455 = vperm.xlu0 %454, %v429
    %v456 = vpop.permute.xlu0 %455
    %459 = vset.pattern.permute.xlu0 0
    %460 = vperm.xlu0 %459, %v430
    %v461 = vpop.permute.xlu0 %460
    %464 = vset.pattern.permute.xlu0 0
    %465 = vperm.xlu0 %464, %v431
    %v466 = vpop.permute.xlu0 %465
    %469 = vset.pattern.permute.xlu0 0
    %470 = vperm.xlu0 %469, %v432
    %v471 = vpop.permute.xlu0 %470
    %474 = vset.pattern.permute.xlu0 0
    %475 = vperm.xlu0 %474, %v433
    %v476 = vpop.permute.xlu0 %475
    %479 = vset.pattern.permute.xlu0 0
    %480 = vperm.xlu0 %479, %v434
    %v481 = vpop.permute.xlu0 %480
    %484 = vset.pattern.permute.xlu0 0
    %485 = vperm.xlu0 %484, %v435
    %v486 = vpop.permute.xlu0 %485
    %489 = vset.pattern.permute.xlu0 0
    %490 = vperm.xlu0 %489, %v436
    %v491 = vpop.permute.xlu0 %490
    %494 = vset.pattern.permute.xlu0 0
    %495 = vperm.xlu0 %494, %v437
    %v496 = vpop.permute.xlu0 %495
    %vm498 = vcmask 523264
    %v500 = vsel %vm498, %v403, 0
    %v503 = vsel %vm498, %v405, 0
    %v506 = vsel %vm498, %v407, 0
    %v509 = vsel %vm498, %v409, 0
    %v512 = vsel %vm498, %v411, 0
    %v515 = vsel %vm498, %v413, 0
    %v518 = vsel %vm498, %v415, 0
    %v521 = vsel %vm498, %v417, 0
    %v524 = vsel %vm498, %v419, 0
    %v527 = vsel %vm498, %v421, 0
    %v530 = vsel %vm498, %v423, 0
    %v533 = vsel %vm498, %v425, 0
    %535 = vmatprep.subr.mxu0 0.0
    %536 = vmatpush1.msra.mxu0 %v378
    %537 = vmatprep.subr.mxu0 0.0
    %538 = vmatpush1.msra.mxu0 %v379
    %539 = vmatprep.subr.mxu0 0.0
    %540 = vmatpush1.msra.mxu0 %v380
    %541 = vmatprep.subr.mxu0 0.0
    %542 = vmatpush1.msra.mxu0 %v381
    %543 = vmatprep.subr.mxu0 0.0
    %544 = vmatpush1.msra.mxu0 %v382
    %545 = vmatprep.subr.mxu0 0.0
    %546 = vmatpush1.msra.mxu0 %v383
    %547 = vmatprep.subr.mxu0 0.0
    %548 = vmatpush1.msra.mxu0 %v384
    %549 = vmatprep.subr.mxu0 0.0
    %550 = vmatpush1.msra.mxu0 %v385
    %551 = vmatprep.subr.mxu0 0.0
    %552 = vmatpush1.msra.mxu0 %v386
    %553 = vmatprep.subr.mxu0 0.0
    %554 = vmatpush1.msra.mxu0 %v387
    %555 = vmatprep.subr.mxu0 0.0
    %556 = vmatpush1.msra.mxu0 %v388
    %557 = vmatprep.subr.mxu0 0.0
    %558 = vmatpush1.msra.mxu0 %v389
    %559 = vmatprep.subr.mxu0 0.0
    %560 = vmatpush1.msra.mxu0 %v390
    %561 = vmatprep.subr.mxu0 0.0
    %562 = vmatpush1.msra.mxu0 %v391
    %563 = vmatprep.subr.mxu0 0.0
    %564 = vmatpush1.msra.mxu0 %v392
    %565 = vmatprep.subr.mxu0 0.0
    %566 = vmatpush1.msra.mxu0 %v393
    %567 = vmatprep.subr.mxu0 0.0
    %568 = vmatpush1.msra.mxu0 %v394
    %569 = vmatprep.subr.mxu0 0.0
    %570 = vmatpush1.msra.mxu0 %v395
    %571 = vmatprep.subr.mxu0 0.0
    %572 = vmatpush1.msra.mxu0 %v396
    %573 = vmatprep.subr.mxu0 0.0
    %574 = vmatpush1.msra.mxu0 %v397
    %575 = vmatprep.subr.mxu0 0.0
    %576 = vmatpush1.msra.mxu0 %v398
    %577 = vmatprep.subr.mxu0 0.0
    %578 = vmatpush1.msra.mxu0 %v399
    %579 = vmatprep.subr.mxu0 0.0
    %580 = vmatpush1.msra.mxu0 %v400
    %581 = vmatprep.subr.mxu0 0.0
    %582 = vmatpush1.msra.mxu0 %v401
    %583 = vmatprep.subr.mxu0 0.0
    %584 = vmatpush1.msra.mxu0 0.0
    %585 = vmatprep.subr.mxu0 0.0
    %586 = vmatpush1.msra.mxu0 0.0
    %587 = vmatprep.subr.mxu0 0.0
    %588 = vmatpush1.msra.mxu0 0.0
    %589 = vmatprep.subr.mxu0 0.0
    %590 = vmatpush1.msra.mxu0 0.0
    %591 = vmatprep.subr.mxu0 0.0
    %592 = vmatpush1.msra.mxu0 0.0
    %593 = vmatprep.subr.mxu0 0.0
    %594 = vmatpush1.msra.mxu0 0.0
    %595 = vmatprep.subr.mxu0 0.0
    %596 = vmatpush1.msra.mxu0 0.0
    %597 = vmatprep.subr.mxu0 0.0
    %598 = vmatpush1.msra.mxu0 0.0
    %599 = vmatprep.mubr.f32.mxu0 %v500
    %600 = vmatmul.mubr.f32.gmra.mrb[0].mxu0 %v402
    %v601 = vpop.f32.mrb[0].mxu0
    %v602 = vadd.f32 %v441, %v601
    %v603 = vpop.f32.mrb[0].mxu0
    %604 = vmatprep.mubr.f32.mxu0 %v503
    %605 = vmatmul.mubr.f32.gmra.mrb[0].mxu0 %v404
    %v606 = vpop.f32.mrb[0].mxu0
    %v607 = vadd.f32 %v446, %v606
    %v608 = vpop.f32.mrb[0].mxu0
    %609 = vmatprep.mubr.f32.mxu0 %v506
    %610 = vmatmul.mubr.f32.gmra.mrb[0].mxu0 %v406
    %v611 = vpop.f32.mrb[0].mxu0
    %v612 = vadd.f32 %v451, %v611
    %v613 = vpop.f32.mrb[0].mxu0
    %614 = vmatprep.mubr.f32.mxu0 %v509
    %615 = vmatmul.mubr.f32.gmra.mrb[0].mxu0 %v408
    %v616 = vpop.f32.mrb[0].mxu0
    %v617 = vadd.f32 %v456, %v616
    %v618 = vpop.f32.mrb[0].mxu0
    %619 = vmatprep.mubr.f32.mxu0 %v512
    %620 = vmatmul.mubr.f32.gmra.mrb[0].mxu0 %v410
    %v621 = vpop.f32.mrb[0].mxu0
    %v622 = vadd.f32 %v461, %v621
    %v623 = vpop.f32.mrb[0].mxu0
    %624 = vmatprep.mubr.f32.mxu0 %v515
    %625 = vmatmul.mubr.f32.gmra.mrb[0].mxu0 %v412
    %v626 = vpop.f32.mrb[0].mxu0
    %v627 = vadd.f32 %v466, %v626
    %v628 = vpop.f32.mrb[0].mxu0
    %629 = vmatprep.mubr.f32.mxu0 %v518
    %630 = vmatmul.mubr.f32.gmra.mrb[0].mxu0 %v414
    %v631 = vpop.f32.mrb[0].mxu0
    %v632 = vadd.f32 %v471, %v631
    %v633 = vpop.f32.mrb[0].mxu0
    %634 = vmatprep.mubr.f32.mxu0 %v521
    %635 = vmatmul.mubr.f32.gmra.mrb[0].mxu0 %v416
    %v636 = vpop.f32.mrb[0].mxu0
    %v637 = vadd.f32 %v476, %v636
    %v638 = vpop.f32.mrb[0].mxu0
    %639 = vmatprep.mubr.f32.mxu0 %v524
    %640 = vmatmul.mubr.f32.gmra.mrb[0].mxu0 %v418
    %v641 = vpop.f32.mrb[0].mxu0
    %v642 = vadd.f32 %v481, %v641
    %v643 = vpop.f32.mrb[0].mxu0
    %644 = vmatprep.mubr.f32.mxu0 %v527
    %645 = vmatmul.mubr.f32.gmra.mrb[0].mxu0 %v420
    %v646 = vpop.f32.mrb[0].mxu0
    %v647 = vadd.f32 %v486, %v646
    %v648 = vpop.f32.mrb[0].mxu0
    %649 = vmatprep.mubr.f32.mxu0 %v530
    %650 = vmatmul.mubr.f32.gmra.mrb[0].mxu0 %v422
    %v651 = vpop.f32.mrb[0].mxu0
    %v652 = vadd.f32 %v491, %v651
    %v653 = vpop.f32.mrb[0].mxu0
    %654 = vmatprep.mubr.f32.mxu0 %v533
    %655 = vmatmul.mubr.f32.gmra.mrb[0].mxu0 %v424
    %v656 = vpop.f32.mrb[0].mxu0
    %v657 = vadd.f32 %v496, %v656
    %v658 = vpop.f32.mrb[0].mxu0
    %659 = vdwg.mxu0
    %v660 = vmax.f32 %v602, 0.0
    %v661 = vmax.f32 %v607, 0.0
    %v662 = vmax.f32 %v612, 0.0
    %v663 = vmax.f32 %v617, 0.0
    %v664 = vmax.f32 %v622, 0.0
    %v665 = vmax.f32 %v627, 0.0
    %v666 = vmax.f32 %v632, 0.0
    %v667 = vmax.f32 %v637, 0.0
    %v668 = vmax.f32 %v642, 0.0
    %v669 = vmax.f32 %v647, 0.0
    %v670 = vmax.f32 %v652, 0.0
    %v671 = vmax.f32 %v657, 0.0
    %v672 = vld [vmem:[%s5] sm:$0xff]
    %v673 = vld [vmem:[%s5 + $0x8] sm:$0xff]
    %v674 = vld [vmem:[%s5 + $0x10] sm:$0xff]
    %v675 = vld [vmem:[%s5 + $0x18] sm:$0xff]
    %v676 = vld [vmem:[%s5 + $0x20] sm:$0xff]
    %v677 = vld [vmem:[%s5 + $0x28] sm:$0xff]
    %v678 = vld [vmem:[%s5 + $0x30] sm:$0xff]
    %v679 = vld [vmem:[%s5 + $0x38] sm:$0xff]
    %v680 = vld [vmem:[%s5 + $0x40] sm:$0xff]
    %v681 = vld [vmem:[%s5 + $0x48] sm:$0xff]
    %v682 = vld [vmem:[%s5 + $0x50] sm:$0xff]
    %v683 = vld [vmem:[%s5 + $0x58] sm:$0xff]
    %v684 = vld [vmem:[%s6] sm:$0xff]
    %v685 = vld [vmem:[%s6 + $0x8] sm:$0xff]
    %v686 = vld [vmem:[%s6 + $0x10] sm:$0xff]
    %v687 = vld [vmem:[%s6 + $0x18] sm:$0xff]
    %v688 = vld [vmem:[%s6 + $0x20] sm:$0xff]
    %v689 = vld [vmem:[%s6 + $0x28] sm:$0xff]
    %v690 = vld [vmem:[%s6 + $0x30] sm:$0xff]
    %v691 = vld [vmem:[%s6 + $0x38] sm:$0xff]
    %v692 = vld [vmem:[%s6 + $0x40] sm:$0xff]
    %v693 = vld [vmem:[%s6 + $0x48] sm:$0xff]
    %v694 = vld [vmem:[%s6 + $0x50] sm:$0xff]
    %v695 = vld [vmem:[%s6 + $0x58] sm:$0xff]
    %697 = vset.pattern.permute.xlu0 0
    %698 = vperm.xlu0 %697, %v684
    %v699 = vpop.permute.xlu0 %698
    %702 = vset.pattern.permute.xlu0 0
    %703 = vperm.xlu0 %702, %v685
    %v704 = vpop.permute.xlu0 %703
    %707 = vset.pattern.permute.xlu0 0
    %708 = vperm.xlu0 %707, %v686
    %v709 = vpop.permute.xlu0 %708
    %712 = vset.pattern.permute.xlu0 0
    %713 = vperm.xlu0 %712, %v687
    %v714 = vpop.permute.xlu0 %713
    %717 = vset.pattern.permute.xlu0 0
    %718 = vperm.xlu0 %717, %v688
    %v719 = vpop.permute.xlu0 %718
    %722 = vset.pattern.permute.xlu0 0
    %723 = vperm.xlu0 %722, %v689
    %v724 = vpop.permute.xlu0 %723
    %727 = vset.pattern.permute.xlu0 0
    %728 = vperm.xlu0 %727, %v690
    %v729 = vpop.permute.xlu0 %728
    %732 = vset.pattern.permute.xlu0 0
    %733 = vperm.xlu0 %732, %v691
    %v734 = vpop.permute.xlu0 %733
    %737 = vset.pattern.permute.xlu0 0
    %738 = vperm.xlu0 %737, %v692
    %v739 = vpop.permute.xlu0 %738
    %742 = vset.pattern.permute.xlu0 0
    %743 = vperm.xlu0 %742, %v693
    %v744 = vpop.permute.xlu0 %743
    %747 = vset.pattern.permute.xlu0 0
    %748 = vperm.xlu0 %747, %v694
    %v749 = vpop.permute.xlu0 %748
    %752 = vset.pattern.permute.xlu0 0
    %753 = vperm.xlu0 %752, %v695
    %v754 = vpop.permute.xlu0 %753
    %vm756 = vcmask 785408
    %v758 = vsel %vm756, %v672, 0
    %v761 = vsel %vm756, %v673, 0
    %v764 = vsel %vm756, %v674, 0
    %v767 = vsel %vm756, %v675, 0
    %v770 = vsel %vm756, %v676, 0
    %v773 = vsel %vm756, %v677, 0
    %v776 = vsel %vm756, %v678, 0
    %v779 = vsel %vm756, %v679, 0
    %v782 = vsel %vm756, %v680, 0
    %v785 = vsel %vm756, %v681, 0
    %v788 = vsel %vm756, %v682, 0
    %v791 = vsel %vm756, %v683, 0
    %793 = vmatprep.subr.mxu0 0.0
    %794 = vmatpush1.msra.mxu0 %v660
    %795 = vmatprep.subr.mxu0 0.0
    %796 = vmatpush1.msra.mxu0 %v661
    %797 = vmatprep.subr.mxu0 0.0
    %798 = vmatpush1.msra.mxu0 %v662
    %799 = vmatprep.subr.mxu0 0.0
    %800 = vmatpush1.msra.mxu0 %v663
    %801 = vmatprep.subr.mxu0 0.0
    %802 = vmatpush1.msra.mxu0 %v664
    %803 = vmatprep.subr.mxu0 0.0
    %804 = vmatpush1.msra.mxu0 %v665
    %805 = vmatprep.subr.mxu0 0.0
    %806 = vmatpush1.msra.mxu0 %v666
    %807 = vmatprep.subr.mxu0 0.0
    %808 = vmatpush1.msra.mxu0 %v667
    %809 = vmatprep.subr.mxu0 0.0
    %810 = vmatpush1.msra.mxu0 %v668
    %811 = vmatprep.subr.mxu0 0.0
    %812 = vmatpush1.msra.mxu0 %v669
    %813 = vmatprep.subr.mxu0 0.0
    %814 = vmatpush1.msra.mxu0 %v670
    %815 = vmatprep.subr.mxu0 0.0
    %816 = vmatpush1.msra.mxu0 %v671
    %817 = vmatprep.subr.mxu0 0.0
    %818 = vmatpush1.msra.mxu0 0.0
    %819 = vmatprep.subr.mxu0 0.0
    %820 = vmatpush1.msra.mxu0 0.0
    %821 = vmatprep.subr.mxu0 0.0
    %822 = vmatpush1.msra.mxu0 0.0
    %823 = vmatprep.subr.mxu0 0.0
    %824 = vmatpush1.msra.mxu0 0.0
    %825 = vmatprep.subr.mxu0 0.0
    %826 = vmatpush1.msra.mxu0 0.0
    %827 = vmatprep.subr.mxu0 0.0
    %828 = vmatpush1.msra.mxu0 0.0
    %829 = vmatprep.subr.mxu0 0.0
    %830 = vmatpush1.msra.mxu0 0.0
    %831 = vmatprep.subr.mxu0 0.0
    %832 = vmatpush1.msra.mxu0 0.0
    %833 = vmatprep.subr.mxu0 0.0
    %834 = vmatpush1.msra.mxu0 0.0
    %835 = vmatprep.subr.mxu0 0.0
    %836 = vmatpush1.msra.mxu0 0.0
    %837 = vmatprep.subr.mxu0 0.0
    %838 = vmatpush1.msra.mxu0 0.0
    %839 = vmatprep.subr.mxu0 0.0
    %840 = vmatpush1.msra.mxu0 0.0
    %841 = vmatprep.subr.mxu0 0.0
    %842 = vmatpush1.msra.mxu0 0.0
    %843 = vmatprep.subr.mxu0 0.0
    %844 = vmatpush1.msra.mxu0 0.0
    %845 = vmatprep.subr.mxu0 0.0
    %846 = vmatpush1.msra.mxu0 0.0
    %847 = vmatprep.subr.mxu0 0.0
    %848 = vmatpush1.msra.mxu0 0.0
    %849 = vmatprep.subr.mxu0 0.0
    %850 = vmatpush1.msra.mxu0 0.0
    %851 = vmatprep.subr.mxu0 0.0
    %852 = vmatpush1.msra.mxu0 0.0
    %853 = vmatprep.subr.mxu0 0.0
    %854 = vmatpush1.msra.mxu0 0.0
    %855 = vmatprep.subr.mxu0 0.0
    %856 = vmatpush1.msra.mxu0 0.0
    %857 = vmatprep.mubr.f32.mxu0 0.0
    %858 = vmatmul.mubr.f32.gmra.mrb[0].mxu0 %v758
    %v859 = vpop.f32.mrb[0].mxu0
    %v860 = vadd.f32 %v699, %v859
    %v861 = vpop.f32.mrb[0].mxu0
    %862 = vmatprep.mubr.f32.mxu0 0.0
    %863 = vmatmul.mubr.f32.gmra.mrb[0].mxu0 %v761
    %v864 = vpop.f32.mrb[0].mxu0
    %v865 = vadd.f32 %v704, %v864
    %v866 = vpop.f32.mrb[0].mxu0
    %867 = vmatprep.mubr.f32.mxu0 0.0
    %868 = vmatmul.mubr.f32.gmra.mrb[0].mxu0 %v764
    %v869 = vpop.f32.mrb[0].mxu0
    %v870 = vadd.f32 %v709, %v869
    %v871 = vpop.f32.mrb[0].mxu0
    %872 = vmatprep.mubr.f32.mxu0 0.0
    %873 = vmatmul.mubr.f32.gmra.mrb[0].mxu0 %v767
    %v874 = vpop.f32.mrb[0].mxu0
    %v875 = vadd.f32 %v714, %v874
    %v876 = vpop.f32.mrb[0].mxu0
    %877 = vmatprep.mubr.f32.mxu0 0.0
    %878 = vmatmul.mubr.f32.gmra.mrb[0].mxu0 %v770
    %v879 = vpop.f32.mrb[0].mxu0
    %v880 = vadd.f32 %v719, %v879
    %v881 = vpop.f32.mrb[0].mxu0
    %882 = vmatprep.mubr.f32.mxu0 0.0
    %883 = vmatmul.mubr.f32.gmra.mrb[0].mxu0 %v773
    %v884 = vpop.f32.mrb[0].mxu0
    %v885 = vadd.f32 %v724, %v884
    %v886 = vpop.f32.mrb[0].mxu0
    %887 = vmatprep.mubr.f32.mxu0 0.0
    %888 = vmatmul.mubr.f32.gmra.mrb[0].mxu0 %v776
    %v889 = vpop.f32.mrb[0].mxu0
    %v890 = vadd.f32 %v729, %v889
    %v891 = vpop.f32.mrb[0].mxu0
    %892 = vmatprep.mubr.f32.mxu0 0.0
    %893 = vmatmul.mubr.f32.gmra.mrb[0].mxu0 %v779
    %v894 = vpop.f32.mrb[0].mxu0
    %v895 = vadd.f32 %v734, %v894
    %v896 = vpop.f32.mrb[0].mxu0
    %897 = vmatprep.mubr.f32.mxu0 0.0
    %898 = vmatmul.mubr.f32.gmra.mrb[0].mxu0 %v782
    %v899 = vpop.f32.mrb[0].mxu0
    %v900 = vadd.f32 %v739, %v899
    %v901 = vpop.f32.mrb[0].mxu0
    %902 = vmatprep.mubr.f32.mxu0 0.0
    %903 = vmatmul.mubr.f32.gmra.mrb[0].mxu0 %v785
    %v904 = vpop.f32.mrb[0].mxu0
    %v905 = vadd.f32 %v744, %v904
    %v906 = vpop.f32.mrb[0].mxu0
    %907 = vmatprep.mubr.f32.mxu0 0.0
    %908 = vmatmul.mubr.f32.gmra.mrb[0].mxu0 %v788
    %v909 = vpop.f32.mrb[0].mxu0
    %v910 = vadd.f32 %v749, %v909
    %v911 = vpop.f32.mrb[0].mxu0
    %912 = vmatprep.mubr.f32.mxu0 0.0
    %913 = vmatmul.mubr.f32.gmra.mrb[0].mxu0 %v791
    %v914 = vpop.f32.mrb[0].mxu0
    %v915 = vadd.f32 %v754, %v914
    %v916 = vpop.f32.mrb[0].mxu0
    %917 = vdwg.mxu0
    %v918 = vmax.f32 %v860, 0.0
    %v919 = vmax.f32 %v865, 0.0
    %v920 = vmax.f32 %v870, 0.0
    %v921 = vmax.f32 %v875, 0.0
    %v922 = vmax.f32 %v880, 0.0
    %v923 = vmax.f32 %v885, 0.0
    %v924 = vmax.f32 %v890, 0.0
    %v925 = vmax.f32 %v895, 0.0
    %v926 = vmax.f32 %v900, 0.0
    %v927 = vmax.f32 %v905, 0.0
    %v928 = vmax.f32 %v910, 0.0
    %v929 = vmax.f32 %v915, 0.0
    %v930 = vld [vmem:[%s7] sm:$0x1]
    %v931 = vld [vmem:[#allocation2] sm:$0x1]
    %933 = vset.pattern.permute.xlu0 0
    %934 = vperm.xlu0 %933, %v931
    %v935 = vpop.permute.xlu0 %934
    %v937 = vlaneseq
    %v938 = vshrl.u32 %v937, 7
    %v939 = vsub.s32 0, %v938
    %v940 = vrot.slane %v935, %v939
    %v942 = vsel %vm756, %v930, 0
    %944 = vmatprep.subr.mxu0 0.0
    %945 = vmatpush1.msra.mxu0 %v918
    %946 = vmatprep.subr.mxu0 0.0
    %947 = vmatpush1.msra.mxu0 %v919
    %948 = vmatprep.subr.mxu0 0.0
    %949 = vmatpush1.msra.mxu0 %v920
    %950 = vmatprep.subr.mxu0 0.0
    %951 = vmatpush1.msra.mxu0 %v921
    %952 = vmatprep.subr.mxu0 0.0
    %953 = vmatpush1.msra.mxu0 %v922
    %954 = vmatprep.subr.mxu0 0.0
    %955 = vmatpush1.msra.mxu0 %v923
    %956 = vmatprep.subr.mxu0 0.0
    %957 = vmatpush1.msra.mxu0 %v924
    %958 = vmatprep.subr.mxu0 0.0
    %959 = vmatpush1.msra.mxu0 %v925
    %960 = vmatprep.subr.mxu0 0.0
    %961 = vmatpush1.msra.mxu0 %v926
    %962 = vmatprep.subr.mxu0 0.0
    %963 = vmatpush1.msra.mxu0 %v927
    %964 = vmatprep.subr.mxu0 0.0
    %965 = vmatpush1.msra.mxu0 %v928
    %966 = vmatprep.subr.mxu0 0.0
    %967 = vmatpush1.msra.mxu0 %v929
    %968 = vmatprep.subr.mxu0 0.0
    %969 = vmatpush1.msra.mxu0 0.0
    %970 = vmatprep.subr.mxu0 0.0
    %971 = vmatpush1.msra.mxu0 0.0
    %972 = vmatprep.subr.mxu0 0.0
    %973 = vmatpush1.msra.mxu0 0.0
    %974 = vmatprep.subr.mxu0 0.0
    %975 = vmatpush1.msra.mxu0 0.0
    %976 = vmatprep.subr.mxu0 0.0
    %977 = vmatpush1.msra.mxu0 0.0
    %978 = vmatprep.subr.mxu0 0.0
    %979 = vmatpush1.msra.mxu0 0.0
    %980 = vmatprep.subr.mxu0 0.0
    %981 = vmatpush1.msra.mxu0 0.0
    %982 = vmatprep.subr.mxu0 0.0
    %983 = vmatpush1.msra.mxu0 0.0
    %984 = vmatprep.subr.mxu0 0.0
    %985 = vmatpush1.msra.mxu0 0.0
    %986 = vmatprep.subr.mxu0 0.0
    %987 = vmatpush1.msra.mxu0 0.0
    %988 = vmatprep.subr.mxu0 0.0
    %989 = vmatpush1.msra.mxu0 0.0
    %990 = vmatprep.subr.mxu0 0.0
    %991 = vmatpush1.msra.mxu0 0.0
    %992 = vmatprep.subr.mxu0 0.0
    %993 = vmatpush1.msra.mxu0 0.0
    %994 = vmatprep.subr.mxu0 0.0
    %995 = vmatpush1.msra.mxu0 0.0
    %996 = vmatprep.subr.mxu0 0.0
    %997 = vmatpush1.msra.mxu0 0.0
    %998 = vmatprep.subr.mxu0 0.0
    %999 = vmatpush1.msra.mxu0 0.0
    %1000 = vmatprep.subr.mxu0 0.0
    %1001 = vmatpush1.msra.mxu0 0.0
    %1002 = vmatprep.subr.mxu0 0.0
    %1003 = vmatpush1.msra.mxu0 0.0
    %1004 = vmatprep.subr.mxu0 0.0
    %1005 = vmatpush1.msra.mxu0 0.0
    %1006 = vmatprep.subr.mxu0 0.0
    %1007 = vmatpush1.msra.mxu0 0.0
    %1008 = vmatprep.mubr.f32.mxu0 0.0
    %1009 = vmatmul.mubr.f32.gmra.mrb[0].mxu0 %v942
    %v1010 = vpop.f32.mrb[0].mxu0
    %v1011 = vadd.f32 %v940, %v1010
    %v1012 = vpop.f32.mrb[0].mxu0
    %1013 = vdwg.mxu0
    %v1014 = vxor.u32 %v1011, 2147483648
    %v1015 = vmul.f32 %v1014, 1.442695
    %v1016 = vpow.pop %v1015
    %v1017 = vadd.f32 %v1016, 1.0
    %v1018 = vrcp.pop %v1017
    %v1019 = vmul.f32 1.0, %v1018
    %1020 = vst [vmem:[#allocation3] sm:$0x1] %v1019
    // Predicated region
    $region38: #{tpu_custom_call.1} parent=1 // pred_check
      _
    $region39: #{tpu_custom_call.1} parent=1 // pred_check_branch
      %1022 = sbr.rel (0) target = $region41
    $region40: #{tpu_custom_call.1} parent=1 // pred_region
      %s1024 = ssub.s32 16, 16
      %1025 = vsyncadd [#allocation4], %s1024
      %s1027 = sshll.u32 [#allocation3], 4
      %s1028 = int_to_ptr.vmem [resolvable:$true] %s1027
      %1030 = dma.vmem_to_hbm [thread:$0]  %s1028, 16, %s9, [#allocation4]
    $region41: #{tpu_custom_call.1} parent=1 // pred_fallthru
      _
    // Predicated region
    $region42: #{tpu_custom_call.1} parent=1 // pred_check
      _
    $region43: #{tpu_custom_call.1} parent=1 // pred_check_branch
      %1032 = sbr.rel (0) target = $region45
    $region44: #{tpu_custom_call.1} parent=1 // pred_region
      %1033 = dma.done [#allocation4], 16
    $region45: #{tpu_custom_call.1} parent=1 // pred_fallthru
      _
    %1034 = vsyncpa [#allocation4], 1

</llo_original>
